<compile_context>
chip_gen: v7x
topology: tpu7x:2x2x1
jax: 0.10.0
libtpu: 0.0.40
codegen_flags: <defaults>
</compile_context>

<pallas_src>
import numpy as np
import jax
import jax.numpy as jnp
from jax.experimental import pallas as pl
from jax.experimental.pallas import tpu as pltpu

# Small-but-consistent configuration (PyTorch defaults were 1250/128/10).
INPUT_LEN = 64
DIM = 32
TOKENS = 8
BATCH = 16
FREQ = INPUT_LEN // 2 + 1            # rfft bins (33)
TD = TOKENS * DIM                    # flat token*channel width (256)
LPAD = 128                           # input padded to a lane tile; col 64 = 1.0 bias feed
FPAD = 128                           # rfft bins padded to a lane tile
ZW = TD + 2 * FPAD                   # fused first-layer output width (512)
NOUT = 128                           # output channels padded to a lane tile


def ptfm_kernel(xin_ref, comb_ref, afreq_ref, w2_ref, wo_ref, b_ref, out_ref):
    """Whole forward for the full batch: 4 MXU matmuls + VPU/EUP elementwise."""
    f32 = jnp.float32
    # Layer 1: [temporal+fusion+conv1 folded | DFT_re | DFT_im] in ONE matmul.
    z = jnp.dot(xin_ref[...], comb_ref[...], preferred_element_type=f32)   # (B, 512)
    h_time = z[:, :TD]                     # x @ (A_time @ W1) + b01 (via ones column)
    re = z[:, TD:TD + FPAD]                # Re(rfft(x)), zero past FREQ
    im = z[:, TD + FPAD:]                  # Im(rfft(x))
    mag = jnp.sqrt(re * re + im * im)      # |rfft(x)|  (EUP)
    # Finish folded conv1 (freq branch) + ReLU.
    h = jnp.maximum(
        h_time + jnp.dot(mag, afreq_ref[...], preferred_element_type=f32), 0.0)
    # Conv #2 as a block-banded (Toeplitz) matmul + ReLU.
    h = jnp.maximum(
        jnp.dot(h, w2_ref[...], preferred_element_type=f32) + b_ref[0:1, :], 0.0)
    # output_proj (Flatten + Linear), lane-padded to 128 outputs.
    out_ref[...] = (jnp.dot(h, wo_ref[...], preferred_element_type=f32)
                    + b_ref[1:2, 0:NOUT])


def prepare_params(params):
    """One-time host-side folding (float64) of PyTorch-layout weights."""
    (wt, bt, wf, bf, wfus, bfus, wc1, bc1, wc2, bc2, wout, bout) = (
        np.asarray(p, dtype=np.float64) for p in params)
    T, D = TOKENS, DIM

    # Fused temporal/fft/fusion projections on the flat (T*D) layout:
    #   h_flat[b, t*D+d] = wfus[t,0]*h_time[b,d] + wfus[t,1]*h_fft[b,d] + bfus[t]
    a_time = np.einsum('dl,t->ltd', wt, wfus[:, 0]).reshape(INPUT_LEN, TD)
    a_freq = np.einsum('df,t->ftd', wf, wfus[:, 1]).reshape(FREQ, TD)
    b0 = (np.outer(wfus[:, 0], bt) + np.outer(wfus[:, 1], bf)
          + bfus[:, None]).reshape(TD)

    def conv_band(w):
        # Conv1d(D, D, k=3, pad=1) over T tokens as a (T*D, T*D) block-banded matrix.
        dout, din, k = w.shape
        band = np.zeros((T * din, T * dout), np.float64)
        for tout in range(T):
            for tap in range(k):
                tin = tout + tap - k // 2
                if 0 <= tin < T:
                    band[tin * din:(tin + 1) * din,
                         tout * dout:(tout + 1) * dout] = w[:, :, tap].T
        return band

    w1 = conv_band(wc1)
    w2 = conv_band(wc2)

    # Fold conv1 into the first layer (no nonlinearity between them):
    #   relu((x@A_t + mag@A_f + b0) @ W1 + b1)
    # = relu(x@(A_t@W1) + mag@(A_f@W1) + (b0@W1 + b1))
    a1_time = a_time @ w1
    a1_freq = a_freq @ w1
    b01 = b0 @ w1 + np.tile(bc1, T)

    # Real/imag DFT matrices: rfft(x)[f] = sum_l x[l] * exp(-2j*pi*l*f/L).
    ang = (-2.0 * np.pi / INPUT_LEN) * (
        np.arange(INPUT_LEN)[:, None] * np.arange(FREQ)[None, :])
    cr, ci = np.cos(ang), np.sin(ang)

    # Fused first-layer matrix [A1_time | DFT_re | DFT_im]; row INPUT_LEN carries
    # the folded bias b01 (paired with the 1.0 column of the padded input).
    comb = np.zeros((LPAD, ZW), np.float64)
    comb[:INPUT_LEN, :TD] = a1_time
    comb[INPUT_LEN, :TD] = b01
    comb[:INPUT_LEN, TD:TD + FREQ] = cr
    comb[:INPUT_LEN, TD + FPAD:TD + FPAD + FREQ] = ci

    afreq = np.zeros((FPAD, TD), np.float64)
    afreq[:FREQ] = a1_freq

    # output_proj: flatten order of (B, T, D) is t*D + d, so wout.T rows match.
    wo = np.zeros((TD, NOUT), np.float64)
    wo[:, :D] = wout.T

    biases = np.zeros((2, TD), np.float64)
    biases[0] = np.tile(bc2, T)      # conv #2 bias
    biases[1, :D] = bout             # output_proj bias (lane-padded)

    return tuple(jnp.asarray(v, dtype=jnp.float32)
                 for v in (comb, afreq, w2, wo, biases))


def ptfm_no_mixer(x, prep):
    """x: (B, 1, L) float32 — same calling convention as the PyTorch module."""
    comb, afreq, w2, wo, biases = prep
    xs = jnp.squeeze(x, axis=1).astype(jnp.float32)               # (B, L)
    B = xs.shape[0]
    # Lane-align to 128; column INPUT_LEN is the 1.0 bias feed (rest stays zero).
    xin = jnp.concatenate(
        [xs, jnp.ones((B, 1), jnp.float32),
         jnp.zeros((B, LPAD - INPUT_LEN - 1), jnp.float32)], axis=1)

    out = pl.pallas_call(
        ptfm_kernel,
        grid=(1,),                                   # single step: whole batch in one pass
        in_specs=[
            pl.BlockSpec((B, LPAD), lambda i: (0, 0)),      # padded input (+1.0 column)
            pl.BlockSpec((LPAD, ZW), lambda i: (0, 0)),     # [A_t@W1 | DFT_re | DFT_im] + bias row
            pl.BlockSpec((FPAD, TD), lambda i: (0, 0)),     # A_f@W1 (|rfft| branch)
            pl.BlockSpec((TD, TD), lambda i: (0, 0)),       # conv #2 banded weight
            pl.BlockSpec((TD, NOUT), lambda i: (0, 0)),     # output projection (lane-padded)
            pl.BlockSpec((2, TD), lambda i: (0, 0)),        # packed biases (conv2, out)
        ],
        out_specs=pl.BlockSpec((B, NOUT), lambda i: (0, 0)),
        out_shape=jax.ShapeDtypeStruct((B, NOUT), jnp.float32),
        compiler_params=pltpu.CompilerParams(
            dimension_semantics=("arbitrary",)),     # no cross-TC split at this batch size
    )(xin, comb, afreq, w2, wo, biases)
    return out[:, :DIM]


# ---------------- deterministic parameter init (PyTorch-style uniform) --------
def init_params(key):
    ks = jax.random.split(key, 12)

    def lin(kw, kb, fan_in, fan_out):
        bound = 1.0 / float(np.sqrt(fan_in))
        w = jax.random.uniform(kw, (fan_out, fan_in), jnp.float32, -bound, bound)
        b = jax.random.uniform(kb, (fan_out,), jnp.float32, -bound, bound)
        return w, b

    def conv(kw, kb, cin, cout, k):
        bound = 1.0 / float(np.sqrt(cin * k))
        w = jax.random.uniform(kw, (cout, cin, k), jnp.float32, -bound, bound)
        b = jax.random.uniform(kb, (cout,), jnp.float32, -bound, bound)
        return w, b

    wt, bt = lin(ks[0], ks[1], INPUT_LEN, DIM)
    wf, bf = lin(ks[2], ks[3], FREQ, DIM)
    wfus, bfus = lin(ks[4], ks[5], 2, TOKENS)
    wc1, bc1 = conv(ks[6], ks[7], DIM, DIM, 3)
    wc2, bc2 = conv(ks[8], ks[9], DIM, DIM, 3)
    wout, bout = lin(ks[10], ks[11], TOKENS * DIM, DIM)
    return (wt, bt, wf, bf, wfus, bfus, wc1, bc1, wc2, bc2, wout, bout)


# ---------------- pure-JAX reference (mirrors the PyTorch forward) -------------
def reference(x, params):
    wt, bt, wf, bf, wfus, bfus, wc1, bc1, wc2, bc2, wout, bout = params
    hp = jax.lax.Precision.HIGHEST
    xs = jnp.squeeze(x, axis=1)
    h_time = jnp.dot(xs, wt.T, precision=hp) + bt
    h_fft = jnp.dot(jnp.abs(jnp.fft.rfft(xs, axis=1)), wf.T, precision=hp) + bf
    hperm = jnp.stack([h_time, h_fft], axis=-1)                 # (B, D, 2)
    h_fused = jnp.einsum('bdc,tc->btd', hperm, wfus, precision=hp) + bfus[None, :, None]

    def conv_relu(h, w, b):
        y = jax.lax.conv_general_dilated(
            h, w, window_strides=(1,), padding=((1, 1),),
            dimension_numbers=('NWC', 'OIW', 'NWC'), precision=hp)
        return jnp.maximum(y + b[None, None, :], 0.0)

    h_conv = conv_relu(conv_relu(h_fused, wc1, bc1), wc2, bc2)
    B = xs.shape[0]
    return jnp.dot(h_conv.reshape(B, TOKENS * DIM), wout.T, precision=hp) + bout


if __name__ == "__main__":
    key = jax.random.PRNGKey(0)
    pkey, xkey = jax.random.split(key)
    params = init_params(pkey)
    prep = prepare_params(params)          # one-time host-side weight folding
    x = jax.random.normal(xkey, (BATCH, 1, INPUT_LEN), jnp.float32)

    out = jax.block_until_ready(ptfm_no_mixer(x, prep))
    ref = reference(x, params)
    np.testing.assert_allclose(np.asarray(out), np.asarray(ref), rtol=2e-3, atol=2e-3)
    print("KERNEL_OK")
</pallas_src>

<mosaic_0001>
module attributes {stable_mosaic.version = 11 : i64} {
  func.func @ptfm_kernel(%arg0: i32, %arg1: memref<16x128xf32, #tpu.memory_space<vmem>>, %arg2: memref<128x512xf32, #tpu.memory_space<vmem>>, %arg3: memref<128x256xf32, #tpu.memory_space<vmem>>, %arg4: memref<256x256xf32, #tpu.memory_space<vmem>>, %arg5: memref<256x128xf32, #tpu.memory_space<vmem>>, %arg6: memref<2x256xf32, #tpu.memory_space<vmem>>, %arg7: memref<16x128xf32, #tpu.memory_space<vmem>>) attributes {dimension_semantics = [#tpu.dimension_semantics<arbitrary>], iteration_bounds = array<i64: 1>, scalar_prefetch = 0 : i64, scratch_operands = 0 : i64, tpu.core_type = #tpu.core_type<tc>, window_params = [{pipeline_mode = #tpu.pipeline_mode<synchronous>, transform_indices = @transform_0, window_bounds = array<i64: 16, 128>}, {pipeline_mode = #tpu.pipeline_mode<synchronous>, transform_indices = @transform_1, window_bounds = array<i64: 128, 512>}, {pipeline_mode = #tpu.pipeline_mode<synchronous>, transform_indices = @transform_2, window_bounds = array<i64: 128, 256>}, {pipeline_mode = #tpu.pipeline_mode<synchronous>, transform_indices = @transform_3, window_bounds = array<i64: 256, 256>}, {pipeline_mode = #tpu.pipeline_mode<synchronous>, transform_indices = @transform_4, window_bounds = array<i64: 256, 128>}, {pipeline_mode = #tpu.pipeline_mode<synchronous>, transform_indices = @transform_5, window_bounds = array<i64: 2, 256>}, {pipeline_mode = #tpu.pipeline_mode<synchronous>, transform_indices = @transform_6, window_bounds = array<i64: 16, 128>}]} {
    %c0 = arith.constant 0 : index
    %c0_0 = arith.constant 0 : index
    %0 = vector.load %arg1[%c0, %c0_0] : memref<16x128xf32, #tpu.memory_space<vmem>>, vector<16x128xf32>
    %c0_1 = arith.constant 0 : index
    %c0_2 = arith.constant 0 : index
    %1 = vector.load %arg2[%c0_1, %c0_2] : memref<128x512xf32, #tpu.memory_space<vmem>>, vector<128x512xf32>
    %cst = arith.constant dense<0.000000e+00> : vector<16x512xf32>
    %2 = tpu.matmul %0, %1, %cst {dimension_numbers = #tpu.dot_dimension_numbers<[1], [0], [0], [1], [0, 0, 1, 1], [], []>} : vector<16x128xf32>, vector<128x512xf32>, vector<16x512xf32> -> vector<16x512xf32>
    %3 = vector.extract_strided_slice %2 {offsets = [0, 0], sizes = [16, 256], strides = [1, 1]} : vector<16x512xf32> to vector<16x256xf32>
    %4 = vector.extract_strided_slice %2 {offsets = [0, 256], sizes = [16, 128], strides = [1, 1]} : vector<16x512xf32> to vector<16x128xf32>
    %5 = vector.extract_strided_slice %2 {offsets = [0, 384], sizes = [16, 128], strides = [1, 1]} : vector<16x512xf32> to vector<16x128xf32>
    %6 = arith.mulf %4, %4 : vector<16x128xf32>
    %7 = arith.mulf %5, %5 : vector<16x128xf32>
    %8 = arith.addf %6, %7 : vector<16x128xf32>
    %9 = math.sqrt %8 : vector<16x128xf32>
    %c0_3 = arith.constant 0 : index
    %c0_4 = arith.constant 0 : index
    %10 = vector.load %arg3[%c0_3, %c0_4] : memref<128x256xf32, #tpu.memory_space<vmem>>, vector<128x256xf32>
    %cst_5 = arith.constant dense<0.000000e+00> : vector<16x256xf32>
    %11 = tpu.matmul %9, %10, %cst_5 {dimension_numbers = #tpu.dot_dimension_numbers<[1], [0], [0], [1], [0, 0, 1, 1], [], []>} : vector<16x128xf32>, vector<128x256xf32>, vector<16x256xf32> -> vector<16x256xf32>
    %12 = arith.addf %3, %11 : vector<16x256xf32>
    %cst_6 = arith.constant 0.000000e+00 : f32
    %13 = vector.broadcast %cst_6 : f32 to vector<16x256xf32>
    %14 = arith.maximumf %12, %13 : vector<16x256xf32>
    %c0_7 = arith.constant 0 : index
    %c0_8 = arith.constant 0 : index
    %15 = vector.load %arg4[%c0_7, %c0_8] : memref<256x256xf32, #tpu.memory_space<vmem>>, vector<256x256xf32>
    %cst_9 = arith.constant dense<0.000000e+00> : vector<16x256xf32>
    %16 = tpu.matmul %14, %15, %cst_9 {dimension_numbers = #tpu.dot_dimension_numbers<[1], [0], [0], [1], [0, 0, 1, 1], [], []>} : vector<16x256xf32>, vector<256x256xf32>, vector<16x256xf32> -> vector<16x256xf32>
    %c0_10 = arith.constant 0 : index
    %c0_11 = arith.constant 0 : index
    %17 = vector.load %arg6[%c0_10, %c0_11] : memref<2x256xf32, #tpu.memory_space<vmem>>, vector<1x256xf32>
    %18 = vector.broadcast %17 : vector<1x256xf32> to vector<16x256xf32>
    %19 = arith.addf %16, %18 : vector<16x256xf32>
    %cst_12 = arith.constant 0.000000e+00 : f32
    %20 = vector.broadcast %cst_12 : f32 to vector<16x256xf32>
    %21 = arith.maximumf %19, %20 : vector<16x256xf32>
    %c0_13 = arith.constant 0 : index
    %c0_14 = arith.constant 0 : index
    %22 = vector.load %arg5[%c0_13, %c0_14] : memref<256x128xf32, #tpu.memory_space<vmem>>, vector<256x128xf32>
    %cst_15 = arith.constant dense<0.000000e+00> : vector<16x128xf32>
    %23 = tpu.matmul %21, %22, %cst_15 {dimension_numbers = #tpu.dot_dimension_numbers<[1], [0], [0], [1], [0, 0, 1, 1], [], []>} : vector<16x256xf32>, vector<256x128xf32>, vector<16x128xf32> -> vector<16x128xf32>
    %c1 = arith.constant 1 : index
    %c0_16 = arith.constant 0 : index
    %24 = vector.load %arg6[%c1, %c0_16] : memref<2x256xf32, #tpu.memory_space<vmem>>, vector<1x128xf32>
    %25 = vector.broadcast %24 : vector<1x128xf32> to vector<16x128xf32>
    %26 = arith.addf %23, %25 : vector<16x128xf32>
    %c0_17 = arith.constant 0 : index
    %c0_18 = arith.constant 0 : index
    %27 = vector.load %arg7[%c0_17, %c0_18] : memref<16x128xf32, #tpu.memory_space<vmem>>, vector<16x128xf32>
    tpu.vector_store %arg7[%c0_17, %c0_18], %26 {strides = array<i32>} : memref<16x128xf32, #tpu.memory_space<vmem>>, vector<16x128xf32>,
    return
  }
  func.func @transform_0(%arg0: i32) -> (i32, i32) {
    %c0_i32 = arith.constant 0 : i32
    %c0_i32_0 = arith.constant 0 : i32
    %c0_i32_1 = arith.constant 0 : i32
    return %c0_i32, %c0_i32_0 : i32, i32
  }
  func.func @transform_1(%arg0: i32) -> (i32, i32) {
    %c0_i32 = arith.constant 0 : i32
    %c0_i32_0 = arith.constant 0 : i32
    %c0_i32_1 = arith.constant 0 : i32
    return %c0_i32, %c0_i32_0 : i32, i32
  }
  func.func @transform_2(%arg0: i32) -> (i32, i32) {
    %c0_i32 = arith.constant 0 : i32
    %c0_i32_0 = arith.constant 0 : i32
    %c0_i32_1 = arith.constant 0 : i32
    return %c0_i32, %c0_i32_0 : i32, i32
  }
  func.func @transform_3(%arg0: i32) -> (i32, i32) {
    %c0_i32 = arith.constant 0 : i32
    %c0_i32_0 = arith.constant 0 : i32
    %c0_i32_1 = arith.constant 0 : i32
    return %c0_i32, %c0_i32_0 : i32, i32
  }
  func.func @transform_4(%arg0: i32) -> (i32, i32) {
    %c0_i32 = arith.constant 0 : i32
    %c0_i32_0 = arith.constant 0 : i32
    %c0_i32_1 = arith.constant 0 : i32
    return %c0_i32, %c0_i32_0 : i32, i32
  }
  func.func @transform_5(%arg0: i32) -> (i32, i32) {
    %c0_i32 = arith.constant 0 : i32
    %c0_i32_0 = arith.constant 0 : i32
    %c0_i32_1 = arith.constant 0 : i32
    return %c0_i32, %c0_i32_0 : i32, i32
  }
  func.func @transform_6(%arg0: i32) -> (i32, i32) {
    %c0_i32 = arith.constant 0 : i32
    %c0_i32_0 = arith.constant 0 : i32
    %c0_i32_1 = arith.constant 0 : i32
    return %c0_i32, %c0_i32_0 : i32, i32
  }
}

</mosaic_0001>

<llo_original>
// kernel: tpu_custom_call.1
$region0: #{tpu_custom_call.1}
  #allocation0 [shape = 'u32[]', space=smem, size = 0x4, offset = 0x4, fixed_abs, tag = 'smem constant byte address 0x4 - core index']
  #allocation1 [shape = 'u32[144,128]{1,0:T(1,128)}', space=vmem, size = 0x12000, scoped, tag = 'internal scratch']
  %s0 = inlined_call_operand.hbm [shape: f32[16,128], index: 0, kind: input, shape index: {}]
  %s1 = inlined_call_operand.hbm [shape: f32[128,512], index: 1, kind: input, shape index: {}]
  %s2 = inlined_call_operand.hbm [shape: f32[128,256], index: 2, kind: input, shape index: {}]
  %s3 = inlined_call_operand.hbm [shape: f32[256,256], index: 3, kind: input, shape index: {}]
  %s4 = inlined_call_operand.hbm [shape: f32[256,128], index: 4, kind: input, shape index: {}]
  %s5 = inlined_call_operand.vmem [shape: f32[2,256], index: 5, kind: input, shape index: {}]
  %s6 = inlined_call_operand.hbm [shape: f32[16,128], index: 6, kind: output, shape index: {}]
  %s7 = sld [smem:[#allocation0]]
  $region54: #{tpu_custom_call.1} parent=0
    _
  %s9 = ssub.s32 1, %s7
  %s10 = scalar_select 0, %s9, %s7
  $region1: #{tpu_custom_call.1} parent=0
    #allocation2 [shape = 'u8[8192]{0}', space=vmem, size = 0x2000, scoped, tag = 'input window, operand 0, single buffered']
    #allocation3 [shape = 's32[1]{0}', space=sflag, size = 0x4, scoped, tag = 'scoped memory for tpu_custom_call.1']
    #allocation4 [shape = 's32[1]{0}', space=sflag, size = 0x4, scoped, tag = 'scoped memory for tpu_custom_call.1']
    #allocation5 [shape = 'u8[262144]{0}', space=vmem, size = 0x40000, scoped, tag = 'input window, operand 1, single buffered']
    #allocation6 [shape = 's32[1]{0}', space=sflag, size = 0x4, scoped, tag = 'scoped memory for tpu_custom_call.1']
    #allocation7 [shape = 'u8[131072]{0}', space=vmem, size = 0x20000, scoped, tag = 'input window, operand 2, single buffered']
    #allocation8 [shape = 'u8[262144]{0}', space=vmem, size = 0x40000, scoped, tag = 'input window, operand 3, single buffered']
    #allocation9 [shape = 's32[1]{0}', space=sflag, size = 0x4, scoped, tag = 'scoped memory for tpu_custom_call.1']
    #allocation10 [shape = 'u8[131072]{0}', space=vmem, size = 0x20000, scoped, tag = 'input window, operand 4, single buffered']
    #allocation11 [shape = 'u8[8192]{0}', space=vmem, size = 0x2000, scoped, tag = 'output window, operand 0, single buffered']
    %11 = vsyncpa [#allocation3], 0
    %12 = vsyncpa [#allocation6], 0
    %13 = vsyncpa [#allocation9], 0
    %14 = vsyncpa [#allocation4], 0
    // Predicated region
    $region2: #{tpu_custom_call.1} parent=1 // pred_check
      _
    $region3: #{tpu_custom_call.1} parent=1 // pred_check_branch
      %16 = sbr.rel (0) target = $region5
    $region4: #{tpu_custom_call.1} parent=1 // pred_region
      %s18 = ssub.s32 256, 256
      %19 = vsyncadd [#allocation3], %s18
      %s20 = sshll.u32 [#allocation2], 4
      %s21 = int_to_ptr.vmem [resolvable:$true] %s20
      %26 = dma.hbm_to_vmem [thread:$0]  %s0, 256, %s21, [#allocation3], 128, 128, 8
    $region5: #{tpu_custom_call.1} parent=1 // pred_fallthru
      _
    // Predicated region
    $region6: #{tpu_custom_call.1} parent=1 // pred_check
      _
    $region7: #{tpu_custom_call.1} parent=1 // pred_check_branch
      %28 = sbr.rel (0) target = $region9
    $region8: #{tpu_custom_call.1} parent=1 // pred_region
      %s30 = ssub.s32 8192, 8192
      %31 = vsyncadd [#allocation6], %s30
      %s32 = sshll.u32 [#allocation5], 4
      %s33 = int_to_ptr.vmem [resolvable:$true] %s32
      %38 = dma.hbm_to_vmem [thread:$0]  %s1, 8192, %s33, [#allocation6], 512, 512, 32
    $region9: #{tpu_custom_call.1} parent=1 // pred_fallthru
      _
    // Predicated region
    $region10: #{tpu_custom_call.1} parent=1 // pred_check
      _
    $region11: #{tpu_custom_call.1} parent=1 // pred_check_branch
      %40 = sbr.rel (0) target = $region13
    $region12: #{tpu_custom_call.1} parent=1 // pred_region
      %s42 = ssub.s32 4096, 4096
      %43 = vsyncadd [#allocation6], %s42
      %s44 = sshll.u32 [#allocation7], 4
      %s45 = int_to_ptr.vmem [resolvable:$true] %s44
      %50 = dma.hbm_to_vmem [thread:$0]  %s2, 4096, %s45, [#allocation6], 256, 256, 16
    $region13: #{tpu_custom_call.1} parent=1 // pred_fallthru
      _
    // Predicated region
    $region14: #{tpu_custom_call.1} parent=1 // pred_check
      _
    $region15: #{tpu_custom_call.1} parent=1 // pred_check_branch
      %52 = sbr.rel (0) target = $region17
    $region16: #{tpu_custom_call.1} parent=1 // pred_region
      %s54 = ssub.s32 8192, 8192
      %55 = vsyncadd [#allocation9], %s54
      %s56 = sshll.u32 [#allocation8], 4
      %s57 = int_to_ptr.vmem [resolvable:$true] %s56
      %62 = dma.hbm_to_vmem [thread:$0]  %s3, 8192, %s57, [#allocation9], 256, 256, 16
    $region17: #{tpu_custom_call.1} parent=1 // pred_fallthru
      _
    // Predicated region
    $region18: #{tpu_custom_call.1} parent=1 // pred_check
      _
    $region19: #{tpu_custom_call.1} parent=1 // pred_check_branch
      %64 = sbr.rel (0) target = $region21
    $region20: #{tpu_custom_call.1} parent=1 // pred_region
      %s66 = ssub.s32 4096, 4096
      %67 = vsyncadd [#allocation9], %s66
      %s68 = sshll.u32 [#allocation10], 4
      %s69 = int_to_ptr.vmem [resolvable:$true] %s68
      %74 = dma.hbm_to_vmem [thread:$0]  %s4, 4096, %s69, [#allocation9], 128, 128, 8
    $region21: #{tpu_custom_call.1} parent=1 // pred_fallthru
      _
    // Predicated region
    $region22: #{tpu_custom_call.1} parent=1 // pred_check
      _
    $region23: #{tpu_custom_call.1} parent=1 // pred_check_branch
      %76 = sbr.rel (0) target = $region25
    $region24: #{tpu_custom_call.1} parent=1 // pred_region
      _
    $region25: #{tpu_custom_call.1} parent=1 // pred_fallthru
      _
    // Predicated region
    $region26: #{tpu_custom_call.1} parent=1 // pred_check
      _
    $region27: #{tpu_custom_call.1} parent=1 // pred_check_branch
      %78 = sbr.rel (0) target = $region29
    $region28: #{tpu_custom_call.1} parent=1 // pred_region
      %79 = dma.done [#allocation3], 256
    $region29: #{tpu_custom_call.1} parent=1 // pred_fallthru
      _
    // Predicated region
    $region30: #{tpu_custom_call.1} parent=1 // pred_check
      _
    $region31: #{tpu_custom_call.1} parent=1 // pred_check_branch
      %81 = sbr.rel (0) target = $region33
    $region32: #{tpu_custom_call.1} parent=1 // pred_region
      %82 = dma.done [#allocation6], 8192
    $region33: #{tpu_custom_call.1} parent=1 // pred_fallthru
      _
    // Predicated region
    $region34: #{tpu_custom_call.1} parent=1 // pred_check
      _
    $region35: #{tpu_custom_call.1} parent=1 // pred_check_branch
      %84 = sbr.rel (0) target = $region37
    $region36: #{tpu_custom_call.1} parent=1 // pred_region
      %85 = dma.done [#allocation6], 4096
    $region37: #{tpu_custom_call.1} parent=1 // pred_fallthru
      _
    // Predicated region
    $region38: #{tpu_custom_call.1} parent=1 // pred_check
      _
    $region39: #{tpu_custom_call.1} parent=1 // pred_check_branch
      %87 = sbr.rel (0) target = $region41
    $region40: #{tpu_custom_call.1} parent=1 // pred_region
      %88 = dma.done [#allocation9], 8192
    $region41: #{tpu_custom_call.1} parent=1 // pred_fallthru
      _
    // Predicated region
    $region42: #{tpu_custom_call.1} parent=1 // pred_check
      _
    $region43: #{tpu_custom_call.1} parent=1 // pred_check_branch
      %90 = sbr.rel (0) target = $region45
    $region44: #{tpu_custom_call.1} parent=1 // pred_region
      %91 = dma.done [#allocation9], 4096
    $region45: #{tpu_custom_call.1} parent=1 // pred_fallthru
      _
    %v92 = vld [vmem:[#allocation2] sm:$0xff]
    %v93 = vld [vmem:[#allocation2 + $0x8] sm:$0xff]
    %v94 = vld [vmem:[#allocation5] sm:$0xff]
    %v95 = vld [vmem:[#allocation5 + $0x8] sm:$0xff]
    %v96 = vld [vmem:[#allocation5 + $0x10] sm:$0xff]
    %v97 = vld [vmem:[#allocation5 + $0x18] sm:$0xff]
    %v98 = vld [vmem:[#allocation5 + $0x20] sm:$0xff]
    %v99 = vld [vmem:[#allocation5 + $0x28] sm:$0xff]
    %v100 = vld [vmem:[#allocation5 + $0x30] sm:$0xff]
    %v101 = vld [vmem:[#allocation5 + $0x38] sm:$0xff]
    %v102 = vld [vmem:[#allocation5 + $0x40] sm:$0xff]
    %v103 = vld [vmem:[#allocation5 + $0x48] sm:$0xff]
    %v104 = vld [vmem:[#allocation5 + $0x50] sm:$0xff]
    %v105 = vld [vmem:[#allocation5 + $0x58] sm:$0xff]
    %v106 = vld [vmem:[#allocation5 + $0x60] sm:$0xff]
    %v107 = vld [vmem:[#allocation5 + $0x68] sm:$0xff]
    %v108 = vld [vmem:[#allocation5 + $0x70] sm:$0xff]
    %v109 = vld [vmem:[#allocation5 + $0x78] sm:$0xff]
    %v110 = vld [vmem:[#allocation5 + $0x80] sm:$0xff]
    %v111 = vld [vmem:[#allocation5 + $0x88] sm:$0xff]
    %v112 = vld [vmem:[#allocation5 + $0x90] sm:$0xff]
    %v113 = vld [vmem:[#allocation5 + $0x98] sm:$0xff]
    %v114 = vld [vmem:[#allocation5 + $0xa0] sm:$0xff]
    %v115 = vld [vmem:[#allocation5 + $0xa8] sm:$0xff]
    %v116 = vld [vmem:[#allocation5 + $0xb0] sm:$0xff]
    %v117 = vld [vmem:[#allocation5 + $0xb8] sm:$0xff]
    %v118 = vld [vmem:[#allocation5 + $0xc0] sm:$0xff]
    %v119 = vld [vmem:[#allocation5 + $0xc8] sm:$0xff]
    %v120 = vld [vmem:[#allocation5 + $0xd0] sm:$0xff]
    %v121 = vld [vmem:[#allocation5 + $0xd8] sm:$0xff]
    %v122 = vld [vmem:[#allocation5 + $0xe0] sm:$0xff]
    %v123 = vld [vmem:[#allocation5 + $0xe8] sm:$0xff]
    %v124 = vld [vmem:[#allocation5 + $0xf0] sm:$0xff]
    %v125 = vld [vmem:[#allocation5 + $0xf8] sm:$0xff]
    %v126 = vld [vmem:[#allocation5 + $0x100] sm:$0xff]
    %v127 = vld [vmem:[#allocation5 + $0x108] sm:$0xff]
    %v128 = vld [vmem:[#allocation5 + $0x110] sm:$0xff]
    %v129 = vld [vmem:[#allocation5 + $0x118] sm:$0xff]
    %v130 = vld [vmem:[#allocation5 + $0x120] sm:$0xff]
    %v131 = vld [vmem:[#allocation5 + $0x128] sm:$0xff]
    %v132 = vld [vmem:[#allocation5 + $0x130] sm:$0xff]
    %v133 = vld [vmem:[#allocation5 + $0x138] sm:$0xff]
    %v134 = vld [vmem:[#allocation5 + $0x140] sm:$0xff]
    %v135 = vld [vmem:[#allocation5 + $0x148] sm:$0xff]
    %v136 = vld [vmem:[#allocation5 + $0x150] sm:$0xff]
    %v137 = vld [vmem:[#allocation5 + $0x158] sm:$0xff]
    %v138 = vld [vmem:[#allocation5 + $0x160] sm:$0xff]
    %v139 = vld [vmem:[#allocation5 + $0x168] sm:$0xff]
    %v140 = vld [vmem:[#allocation5 + $0x170] sm:$0xff]
    %v141 = vld [vmem:[#allocation5 + $0x178] sm:$0xff]
    %v142 = vld [vmem:[#allocation5 + $0x180] sm:$0xff]
    %v143 = vld [vmem:[#allocation5 + $0x188] sm:$0xff]
    %v144 = vld [vmem:[#allocation5 + $0x190] sm:$0xff]
    %v145 = vld [vmem:[#allocation5 + $0x198] sm:$0xff]
    %v146 = vld [vmem:[#allocation5 + $0x1a0] sm:$0xff]
    %v147 = vld [vmem:[#allocation5 + $0x1a8] sm:$0xff]
    %v148 = vld [vmem:[#allocation5 + $0x1b0] sm:$0xff]
    %v149 = vld [vmem:[#allocation5 + $0x1b8] sm:$0xff]
    %v150 = vld [vmem:[#allocation5 + $0x1c0] sm:$0xff]
    %v151 = vld [vmem:[#allocation5 + $0x1c8] sm:$0xff]
    %v152 = vld [vmem:[#allocation5 + $0x1d0] sm:$0xff]
    %v153 = vld [vmem:[#allocation5 + $0x1d8] sm:$0xff]
    %v154 = vld [vmem:[#allocation5 + $0x1e0] sm:$0xff]
    %v155 = vld [vmem:[#allocation5 + $0x1e8] sm:$0xff]
    %v156 = vld [vmem:[#allocation5 + $0x1f0] sm:$0xff]
    %v157 = vld [vmem:[#allocation5 + $0x1f8] sm:$0xff]
    %158 = vmatprep.subr.mxu0 %v95
    %159 = vmatpush1.msra.mxu0 %v94
    %160 = vmatprep.subr.mxu0 %v99
    %161 = vmatpush1.msra.mxu0 %v98
    %162 = vmatprep.subr.mxu0 %v103
    %163 = vmatpush1.msra.mxu0 %v102
    %164 = vmatprep.subr.mxu0 %v107
    %165 = vmatpush1.msra.mxu0 %v106
    %166 = vmatprep.subr.mxu0 %v111
    %167 = vmatpush1.msra.mxu0 %v110
    %168 = vmatprep.subr.mxu0 %v115
    %169 = vmatpush1.msra.mxu0 %v114
    %170 = vmatprep.subr.mxu0 %v119
    %171 = vmatpush1.msra.mxu0 %v118
    %172 = vmatprep.subr.mxu0 %v123
    %173 = vmatpush1.msra.mxu0 %v122
    %174 = vmatprep.subr.mxu0 %v127
    %175 = vmatpush1.msra.mxu0 %v126
    %176 = vmatprep.subr.mxu0 %v131
    %177 = vmatpush1.msra.mxu0 %v130
    %178 = vmatprep.subr.mxu0 %v135
    %179 = vmatpush1.msra.mxu0 %v134
    %180 = vmatprep.subr.mxu0 %v139
    %181 = vmatpush1.msra.mxu0 %v138
    %182 = vmatprep.subr.mxu0 %v143
    %183 = vmatpush1.msra.mxu0 %v142
    %184 = vmatprep.subr.mxu0 %v147
    %185 = vmatpush1.msra.mxu0 %v146
    %186 = vmatprep.subr.mxu0 %v151
    %187 = vmatpush1.msra.mxu0 %v150
    %188 = vmatprep.subr.mxu0 %v155
    %189 = vmatpush1.msra.mxu0 %v154
    %190 = vmatprep.subr.mxu0 0.0
    %191 = vmatpush1.msra.mxu0 0.0
    %192 = vmatprep.subr.mxu0 0.0
    %193 = vmatpush1.msra.mxu0 0.0
    %194 = vmatprep.subr.mxu0 0.0
    %195 = vmatpush1.msra.mxu0 0.0
    %196 = vmatprep.subr.mxu0 0.0
    %197 = vmatpush1.msra.mxu0 0.0
    %198 = vmatprep.subr.mxu0 0.0
    %199 = vmatpush1.msra.mxu0 0.0
    %200 = vmatprep.subr.mxu0 0.0
    %201 = vmatpush1.msra.mxu0 0.0
    %202 = vmatprep.subr.mxu0 0.0
    %203 = vmatpush1.msra.mxu0 0.0
    %204 = vmatprep.subr.mxu0 0.0
    %205 = vmatpush1.msra.mxu0 0.0
    %206 = vmatprep.subr.mxu0 0.0
    %207 = vmatpush1.msra.mxu0 0.0
    %208 = vmatprep.subr.mxu0 0.0
    %209 = vmatpush1.msra.mxu0 0.0
    %210 = vmatprep.subr.mxu0 0.0
    %211 = vmatpush1.msra.mxu0 0.0
    %212 = vmatprep.subr.mxu0 0.0
    %213 = vmatpush1.msra.mxu0 0.0
    %214 = vmatprep.subr.mxu0 0.0
    %215 = vmatpush1.msra.mxu0 0.0
    %216 = vmatprep.subr.mxu0 0.0
    %217 = vmatpush1.msra.mxu0 0.0
    %218 = vmatprep.subr.mxu0 0.0
    %219 = vmatpush1.msra.mxu0 0.0
    %220 = vmatprep.subr.mxu0 0.0
    %221 = vmatpush1.msra.mxu0 0.0
    %222 = vmatprep.mubr.f32.mxu0 0.0
    %223 = vmatmul.mubr.f32.gmra.mrb[0].mxu0 %v92
    %v224 = vpop.f32.mrb[0].mxu0
    %v225 = vadd.f32 0.0, %v224
    %v226 = vpop.f32.mrb[0].mxu0
    %v227 = vadd.f32 0.0, %v226
    %228 = vmatprep.mubr.f32.mxu0 0.0
    %229 = vmatmul.mubr.f32.gmra.mrb[0].mxu0 %v93
    %v230 = vpop.f32.mrb[0].mxu0
    %v231 = vadd.f32 0.0, %v230
    %v232 = vpop.f32.mrb[0].mxu0
    %v233 = vadd.f32 0.0, %v232
    %234 = vdwg.mxu0
    %235 = vmatprep.subr.mxu0 %v97
    %236 = vmatpush1.msra.mxu0 %v96
    %237 = vmatprep.subr.mxu0 %v101
    %238 = vmatpush1.msra.mxu0 %v100
    %239 = vmatprep.subr.mxu0 %v105
    %240 = vmatpush1.msra.mxu0 %v104
    %241 = vmatprep.subr.mxu0 %v109
    %242 = vmatpush1.msra.mxu0 %v108
    %243 = vmatprep.subr.mxu0 %v113
    %244 = vmatpush1.msra.mxu0 %v112
    %245 = vmatprep.subr.mxu0 %v117
    %246 = vmatpush1.msra.mxu0 %v116
    %247 = vmatprep.subr.mxu0 %v121
    %248 = vmatpush1.msra.mxu0 %v120
    %249 = vmatprep.subr.mxu0 %v125
    %250 = vmatpush1.msra.mxu0 %v124
    %251 = vmatprep.subr.mxu0 %v129
    %252 = vmatpush1.msra.mxu0 %v128
    %253 = vmatprep.subr.mxu0 %v133
    %254 = vmatpush1.msra.mxu0 %v132
    %255 = vmatprep.subr.mxu0 %v137
    %256 = vmatpush1.msra.mxu0 %v136
    %257 = vmatprep.subr.mxu0 %v141
    %258 = vmatpush1.msra.mxu0 %v140
    %259 = vmatprep.subr.mxu0 %v145
    %260 = vmatpush1.msra.mxu0 %v144
    %261 = vmatprep.subr.mxu0 %v149
    %262 = vmatpush1.msra.mxu0 %v148
    %263 = vmatprep.subr.mxu0 %v153
    %264 = vmatpush1.msra.mxu0 %v152
    %265 = vmatprep.subr.mxu0 %v157
    %266 = vmatpush1.msra.mxu0 %v156
    %267 = vmatprep.subr.mxu0 0.0
    %268 = vmatpush1.msra.mxu0 0.0
    %269 = vmatprep.subr.mxu0 0.0
    %270 = vmatpush1.msra.mxu0 0.0
    %271 = vmatprep.subr.mxu0 0.0
    %272 = vmatpush1.msra.mxu0 0.0
    %273 = vmatprep.subr.mxu0 0.0
    %274 = vmatpush1.msra.mxu0 0.0
    %275 = vmatprep.subr.mxu0 0.0
    %276 = vmatpush1.msra.mxu0 0.0
    %277 = vmatprep.subr.mxu0 0.0
    %278 = vmatpush1.msra.mxu0 0.0
    %279 = vmatprep.subr.mxu0 0.0
    %280 = vmatpush1.msra.mxu0 0.0
    %281 = vmatprep.subr.mxu0 0.0
    %282 = vmatpush1.msra.mxu0 0.0
    %283 = vmatprep.subr.mxu0 0.0
    %284 = vmatpush1.msra.mxu0 0.0
    %285 = vmatprep.subr.mxu0 0.0
    %286 = vmatpush1.msra.mxu0 0.0
    %287 = vmatprep.subr.mxu0 0.0
    %288 = vmatpush1.msra.mxu0 0.0
    %289 = vmatprep.subr.mxu0 0.0
    %290 = vmatpush1.msra.mxu0 0.0
    %291 = vmatprep.subr.mxu0 0.0
    %292 = vmatpush1.msra.mxu0 0.0
    %293 = vmatprep.subr.mxu0 0.0
    %294 = vmatpush1.msra.mxu0 0.0
    %295 = vmatprep.subr.mxu0 0.0
    %296 = vmatpush1.msra.mxu0 0.0
    %297 = vmatprep.subr.mxu0 0.0
    %298 = vmatpush1.msra.mxu0 0.0
    %299 = vmatprep.mubr.f32.mxu0 0.0
    %300 = vmatmul.mubr.f32.gmra.mrb[0].mxu0 %v92
    %v301 = vpop.f32.mrb[0].mxu0
    %v302 = vadd.f32 0.0, %v301
    %v303 = vpop.f32.mrb[0].mxu0
    %v304 = vadd.f32 0.0, %v303
    %305 = vmatprep.mubr.f32.mxu0 0.0
    %306 = vmatmul.mubr.f32.gmra.mrb[0].mxu0 %v93
    %v307 = vpop.f32.mrb[0].mxu0
    %v308 = vadd.f32 0.0, %v307
    %v309 = vpop.f32.mrb[0].mxu0
    %v310 = vadd.f32 0.0, %v309
    %311 = vdwg.mxu0
    %v312 = vmul.f32 %v302, %v302
    %v313 = vmul.f32 %v308, %v308
    %v314 = vmul.f32 %v304, %v304
    %v315 = vmul.f32 %v310, %v310
    %v316 = vadd.f32 %v312, %v314
    %v317 = vadd.f32 %v313, %v315
    %v318 = vrsqrt.pop %v316
    %v319 = vmul.f32 %v316, %v318
    %vm320 = vcmp.eq.f32.partialorder %v316, inf
    %v321 = vsel %vm320, %v316, %v319
    %vm322 = vcmp.eq.f32.partialorder %v316, 0.0
    %v323 = vand.u32 %v316, 2147483648
    %v324 = vsel %vm322, %v323, %v321
    %v325 = vrsqrt.pop %v317
    %v326 = vmul.f32 %v317, %v325
    %vm327 = vcmp.eq.f32.partialorder %v317, inf
    %v328 = vsel %vm327, %v317, %v326
    %vm329 = vcmp.eq.f32.partialorder %v317, 0.0
    %v330 = vand.u32 %v317, 2147483648
    %v331 = vsel %vm329, %v330, %v328
    %v332 = vld [vmem:[#allocation7] sm:$0xff]
    %v333 = vld [vmem:[#allocation7 + $0x8] sm:$0xff]
    %v334 = vld [vmem:[#allocation7 + $0x10] sm:$0xff]
    %v335 = vld [vmem:[#allocation7 + $0x18] sm:$0xff]
    %v336 = vld [vmem:[#allocation7 + $0x20] sm:$0xff]
    %v337 = vld [vmem:[#allocation7 + $0x28] sm:$0xff]
    %v338 = vld [vmem:[#allocation7 + $0x30] sm:$0xff]
    %v339 = vld [vmem:[#allocation7 + $0x38] sm:$0xff]
    %v340 = vld [vmem:[#allocation7 + $0x40] sm:$0xff]
    %v341 = vld [vmem:[#allocation7 + $0x48] sm:$0xff]
    %v342 = vld [vmem:[#allocation7 + $0x50] sm:$0xff]
    %v343 = vld [vmem:[#allocation7 + $0x58] sm:$0xff]
    %v344 = vld [vmem:[#allocation7 + $0x60] sm:$0xff]
    %v345 = vld [vmem:[#allocation7 + $0x68] sm:$0xff]
    %v346 = vld [vmem:[#allocation7 + $0x70] sm:$0xff]
    %v347 = vld [vmem:[#allocation7 + $0x78] sm:$0xff]
    %v348 = vld [vmem:[#allocation7 + $0x80] sm:$0xff]
    %v349 = vld [vmem:[#allocation7 + $0x88] sm:$0xff]
    %v350 = vld [vmem:[#allocation7 + $0x90] sm:$0xff]
    %v351 = vld [vmem:[#allocation7 + $0x98] sm:$0xff]
    %v352 = vld [vmem:[#allocation7 + $0xa0] sm:$0xff]
    %v353 = vld [vmem:[#allocation7 + $0xa8] sm:$0xff]
    %v354 = vld [vmem:[#allocation7 + $0xb0] sm:$0xff]
    %v355 = vld [vmem:[#allocation7 + $0xb8] sm:$0xff]
    %v356 = vld [vmem:[#allocation7 + $0xc0] sm:$0xff]
    %v357 = vld [vmem:[#allocation7 + $0xc8] sm:$0xff]
    %v358 = vld [vmem:[#allocation7 + $0xd0] sm:$0xff]
    %v359 = vld [vmem:[#allocation7 + $0xd8] sm:$0xff]
    %v360 = vld [vmem:[#allocation7 + $0xe0] sm:$0xff]
    %v361 = vld [vmem:[#allocation7 + $0xe8] sm:$0xff]
    %v362 = vld [vmem:[#allocation7 + $0xf0] sm:$0xff]
    %v363 = vld [vmem:[#allocation7 + $0xf8] sm:$0xff]
    %364 = vmatprep.subr.mxu0 %v333
    %365 = vmatpush1.msra.mxu0 %v332
    %366 = vmatprep.subr.mxu0 %v335
    %367 = vmatpush1.msra.mxu0 %v334
    %368 = vmatprep.subr.mxu0 %v337
    %369 = vmatpush1.msra.mxu0 %v336
    %370 = vmatprep.subr.mxu0 %v339
    %371 = vmatpush1.msra.mxu0 %v338
    %372 = vmatprep.subr.mxu0 %v341
    %373 = vmatpush1.msra.mxu0 %v340
    %374 = vmatprep.subr.mxu0 %v343
    %375 = vmatpush1.msra.mxu0 %v342
    %376 = vmatprep.subr.mxu0 %v345
    %377 = vmatpush1.msra.mxu0 %v344
    %378 = vmatprep.subr.mxu0 %v347
    %379 = vmatpush1.msra.mxu0 %v346
    %380 = vmatprep.subr.mxu0 %v349
    %381 = vmatpush1.msra.mxu0 %v348
    %382 = vmatprep.subr.mxu0 %v351
    %383 = vmatpush1.msra.mxu0 %v350
    %384 = vmatprep.subr.mxu0 %v353
    %385 = vmatpush1.msra.mxu0 %v352
    %386 = vmatprep.subr.mxu0 %v355
    %387 = vmatpush1.msra.mxu0 %v354
    %388 = vmatprep.subr.mxu0 %v357
    %389 = vmatpush1.msra.mxu0 %v356
    %390 = vmatprep.subr.mxu0 %v359
    %391 = vmatpush1.msra.mxu0 %v358
    %392 = vmatprep.subr.mxu0 %v361
    %393 = vmatpush1.msra.mxu0 %v360
    %394 = vmatprep.subr.mxu0 %v363
    %395 = vmatpush1.msra.mxu0 %v362
    %396 = vmatprep.subr.mxu0 0.0
    %397 = vmatpush1.msra.mxu0 0.0
    %398 = vmatprep.subr.mxu0 0.0
    %399 = vmatpush1.msra.mxu0 0.0
    %400 = vmatprep.subr.mxu0 0.0
    %401 = vmatpush1.msra.mxu0 0.0
    %402 = vmatprep.subr.mxu0 0.0
    %403 = vmatpush1.msra.mxu0 0.0
    %404 = vmatprep.subr.mxu0 0.0
    %405 = vmatpush1.msra.mxu0 0.0
    %406 = vmatprep.subr.mxu0 0.0
    %407 = vmatpush1.msra.mxu0 0.0
    %408 = vmatprep.subr.mxu0 0.0
    %409 = vmatpush1.msra.mxu0 0.0
    %410 = vmatprep.subr.mxu0 0.0
    %411 = vmatpush1.msra.mxu0 0.0
    %412 = vmatprep.subr.mxu0 0.0
    %413 = vmatpush1.msra.mxu0 0.0
    %414 = vmatprep.subr.mxu0 0.0
    %415 = vmatpush1.msra.mxu0 0.0
    %416 = vmatprep.subr.mxu0 0.0
    %417 = vmatpush1.msra.mxu0 0.0
    %418 = vmatprep.subr.mxu0 0.0
    %419 = vmatpush1.msra.mxu0 0.0
    %420 = vmatprep.subr.mxu0 0.0
    %421 = vmatpush1.msra.mxu0 0.0
    %422 = vmatprep.subr.mxu0 0.0
    %423 = vmatpush1.msra.mxu0 0.0
    %424 = vmatprep.subr.mxu0 0.0
    %425 = vmatpush1.msra.mxu0 0.0
    %426 = vmatprep.subr.mxu0 0.0
    %427 = vmatpush1.msra.mxu0 0.0
    %428 = vmatprep.mubr.f32.mxu0 0.0
    %429 = vmatmul.mubr.f32.gmra.mrb[0].mxu0 %v324
    %v430 = vpop.f32.mrb[0].mxu0
    %v431 = vadd.f32 0.0, %v430
    %v432 = vpop.f32.mrb[0].mxu0
    %v433 = vadd.f32 0.0, %v432
    %434 = vmatprep.mubr.f32.mxu0 0.0
    %435 = vmatmul.mubr.f32.gmra.mrb[0].mxu0 %v331
    %v436 = vpop.f32.mrb[0].mxu0
    %v437 = vadd.f32 0.0, %v436
    %v438 = vpop.f32.mrb[0].mxu0
    %v439 = vadd.f32 0.0, %v438
    %440 = vdwg.mxu0
    %v441 = vadd.f32 %v225, %v431
    %v442 = vadd.f32 %v227, %v433
    %v443 = vadd.f32 %v231, %v437
    %v444 = vadd.f32 %v233, %v439
    %v445 = vmax.f32 %v441, 0.0
    %v446 = vmax.f32 %v442, 0.0
    %v447 = vmax.f32 %v443, 0.0
    %v448 = vmax.f32 %v444, 0.0
    %v449 = vld [vmem:[#allocation8] sm:$0xff]
    %v450 = vld [vmem:[#allocation8 + $0x8] sm:$0xff]
    %v451 = vld [vmem:[#allocation8 + $0x10] sm:$0xff]
    %v452 = vld [vmem:[#allocation8 + $0x18] sm:$0xff]
    %v453 = vld [vmem:[#allocation8 + $0x20] sm:$0xff]
    %v454 = vld [vmem:[#allocation8 + $0x28] sm:$0xff]
    %v455 = vld [vmem:[#allocation8 + $0x30] sm:$0xff]
    %v456 = vld [vmem:[#allocation8 + $0x38] sm:$0xff]
    %v457 = vld [vmem:[#allocation8 + $0x40] sm:$0xff]
    %v458 = vld [vmem:[#allocation8 + $0x48] sm:$0xff]
    %v459 = vld [vmem:[#allocation8 + $0x50] sm:$0xff]
    %v460 = vld [vmem:[#allocation8 + $0x58] sm:$0xff]
    %v461 = vld [vmem:[#allocation8 + $0x60] sm:$0xff]
    %v462 = vld [vmem:[#allocation8 + $0x68] sm:$0xff]
    %v463 = vld [vmem:[#allocation8 + $0x70] sm:$0xff]
    %v464 = vld [vmem:[#allocation8 + $0x78] sm:$0xff]
    %v465 = vld [vmem:[#allocation8 + $0x80] sm:$0xff]
    %v466 = vld [vmem:[#allocation8 + $0x88] sm:$0xff]
    %v467 = vld [vmem:[#allocation8 + $0x90] sm:$0xff]
    %v468 = vld [vmem:[#allocation8 + $0x98] sm:$0xff]
    %v469 = vld [vmem:[#allocation8 + $0xa0] sm:$0xff]
    %v470 = vld [vmem:[#allocation8 + $0xa8] sm:$0xff]
    %v471 = vld [vmem:[#allocation8 + $0xb0] sm:$0xff]
    %v472 = vld [vmem:[#allocation8 + $0xb8] sm:$0xff]
    %v473 = vld [vmem:[#allocation8 + $0xc0] sm:$0xff]
    %v474 = vld [vmem:[#allocation8 + $0xc8] sm:$0xff]
    %v475 = vld [vmem:[#allocation8 + $0xd0] sm:$0xff]
    %v476 = vld [vmem:[#allocation8 + $0xd8] sm:$0xff]
    %v477 = vld [vmem:[#allocation8 + $0xe0] sm:$0xff]
    %v478 = vld [vmem:[#allocation8 + $0xe8] sm:$0xff]
    %v479 = vld [vmem:[#allocation8 + $0xf0] sm:$0xff]
    %v480 = vld [vmem:[#allocation8 + $0xf8] sm:$0xff]
    %v481 = vld [vmem:[#allocation8 + $0x100] sm:$0xff]
    %v482 = vld [vmem:[#allocation8 + $0x108] sm:$0xff]
    %v483 = vld [vmem:[#allocation8 + $0x110] sm:$0xff]
    %v484 = vld [vmem:[#allocation8 + $0x118] sm:$0xff]
    %v485 = vld [vmem:[#allocation8 + $0x120] sm:$0xff]
    %v486 = vld [vmem:[#allocation8 + $0x128] sm:$0xff]
    %v487 = vld [vmem:[#allocation8 + $0x130] sm:$0xff]
    %v488 = vld [vmem:[#allocation8 + $0x138] sm:$0xff]
    %v489 = vld [vmem:[#allocation8 + $0x140] sm:$0xff]
    %v490 = vld [vmem:[#allocation8 + $0x148] sm:$0xff]
    %v491 = vld [vmem:[#allocation8 + $0x150] sm:$0xff]
    %v492 = vld [vmem:[#allocation8 + $0x158] sm:$0xff]
    %v493 = vld [vmem:[#allocation8 + $0x160] sm:$0xff]
    %v494 = vld [vmem:[#allocation8 + $0x168] sm:$0xff]
    %v495 = vld [vmem:[#allocation8 + $0x170] sm:$0xff]
    %v496 = vld [vmem:[#allocation8 + $0x178] sm:$0xff]
    %v497 = vld [vmem:[#allocation8 + $0x180] sm:$0xff]
    %v498 = vld [vmem:[#allocation8 + $0x188] sm:$0xff]
    %v499 = vld [vmem:[#allocation8 + $0x190] sm:$0xff]
    %v500 = vld [vmem:[#allocation8 + $0x198] sm:$0xff]
    %v501 = vld [vmem:[#allocation8 + $0x1a0] sm:$0xff]
    %v502 = vld [vmem:[#allocation8 + $0x1a8] sm:$0xff]
    %v503 = vld [vmem:[#allocation8 + $0x1b0] sm:$0xff]
    %v504 = vld [vmem:[#allocation8 + $0x1b8] sm:$0xff]
    %v505 = vld [vmem:[#allocation8 + $0x1c0] sm:$0xff]
    %v506 = vld [vmem:[#allocation8 + $0x1c8] sm:$0xff]
    %v507 = vld [vmem:[#allocation8 + $0x1d0] sm:$0xff]
    %v508 = vld [vmem:[#allocation8 + $0x1d8] sm:$0xff]
    %v509 = vld [vmem:[#allocation8 + $0x1e0] sm:$0xff]
    %v510 = vld [vmem:[#allocation8 + $0x1e8] sm:$0xff]
    %v511 = vld [vmem:[#allocation8 + $0x1f0] sm:$0xff]
    %v512 = vld [vmem:[#allocation8 + $0x1f8] sm:$0xff]
    %v513 = vld [vmem:[%s5] ss:$2 sm:$0x3]
    %v515 = vlaneseq
    %v516 = vshrl.u32 %v515, 7
    %v517 = vsub.s32 0, %v516
    %v518 = vrot.slane %v513, %v517
    %v519 = vlaneseq
    %v520 = vshrl.u32 %v519, 7
    %v521 = vsub.s32 1, %v520
    %v522 = vrot.slane %v513, %v521
    %525 = vmatprep.subr.mxu0 %v450
    %526 = vmatpush1.msra.mxu0 %v449
    %527 = vmatprep.subr.mxu0 %v452
    %528 = vmatpush1.msra.mxu0 %v451
    %529 = vmatprep.subr.mxu0 %v454
    %530 = vmatpush1.msra.mxu0 %v453
    %531 = vmatprep.subr.mxu0 %v456
    %532 = vmatpush1.msra.mxu0 %v455
    %533 = vmatprep.subr.mxu0 %v458
    %534 = vmatpush1.msra.mxu0 %v457
    %535 = vmatprep.subr.mxu0 %v460
    %536 = vmatpush1.msra.mxu0 %v459
    %537 = vmatprep.subr.mxu0 %v462
    %538 = vmatpush1.msra.mxu0 %v461
    %539 = vmatprep.subr.mxu0 %v464
    %540 = vmatpush1.msra.mxu0 %v463
    %541 = vmatprep.subr.mxu0 %v466
    %542 = vmatpush1.msra.mxu0 %v465
    %543 = vmatprep.subr.mxu0 %v468
    %544 = vmatpush1.msra.mxu0 %v467
    %545 = vmatprep.subr.mxu0 %v470
    %546 = vmatpush1.msra.mxu0 %v469
    %547 = vmatprep.subr.mxu0 %v472
    %548 = vmatpush1.msra.mxu0 %v471
    %549 = vmatprep.subr.mxu0 %v474
    %550 = vmatpush1.msra.mxu0 %v473
    %551 = vmatprep.subr.mxu0 %v476
    %552 = vmatpush1.msra.mxu0 %v475
    %553 = vmatprep.subr.mxu0 %v478
    %554 = vmatpush1.msra.mxu0 %v477
    %555 = vmatprep.subr.mxu0 %v480
    %556 = vmatpush1.msra.mxu0 %v479
    %557 = vmatprep.subr.mxu0 %v482
    %558 = vmatpush1.msra.mxu0 %v481
    %559 = vmatprep.subr.mxu0 %v484
    %560 = vmatpush1.msra.mxu0 %v483
    %561 = vmatprep.subr.mxu0 %v486
    %562 = vmatpush1.msra.mxu0 %v485
    %563 = vmatprep.subr.mxu0 %v488
    %564 = vmatpush1.msra.mxu0 %v487
    %565 = vmatprep.subr.mxu0 %v490
    %566 = vmatpush1.msra.mxu0 %v489
    %567 = vmatprep.subr.mxu0 %v492
    %568 = vmatpush1.msra.mxu0 %v491
    %569 = vmatprep.subr.mxu0 %v494
    %570 = vmatpush1.msra.mxu0 %v493
    %571 = vmatprep.subr.mxu0 %v496
    %572 = vmatpush1.msra.mxu0 %v495
    %573 = vmatprep.subr.mxu0 %v498
    %574 = vmatpush1.msra.mxu0 %v497
    %575 = vmatprep.subr.mxu0 %v500
    %576 = vmatpush1.msra.mxu0 %v499
    %577 = vmatprep.subr.mxu0 %v502
    %578 = vmatpush1.msra.mxu0 %v501
    %579 = vmatprep.subr.mxu0 %v504
    %580 = vmatpush1.msra.mxu0 %v503
    %581 = vmatprep.subr.mxu0 %v506
    %582 = vmatpush1.msra.mxu0 %v505
    %583 = vmatprep.subr.mxu0 %v508
    %584 = vmatpush1.msra.mxu0 %v507
    %585 = vmatprep.subr.mxu0 %v510
    %586 = vmatpush1.msra.mxu0 %v509
    %587 = vmatprep.subr.mxu0 %v512
    %588 = vmatpush1.msra.mxu0 %v511
    %589 = vmatprep.mubr.f32.mxu0 %v446
    %590 = vmatmul.mubr.f32.gmra.mrb[0].mxu0 %v445
    %v591 = vpop.f32.mrb[0].mxu0
    %v592 = vadd.f32 %v518, %v591
    %v593 = vpop.f32.mrb[0].mxu0
    %v594 = vadd.f32 %v522, %v593
    %595 = vmatprep.mubr.f32.mxu0 %v448
    %596 = vmatmul.mubr.f32.gmra.mrb[0].mxu0 %v447
    %v597 = vpop.f32.mrb[0].mxu0
    %v598 = vadd.f32 %v518, %v597
    %v599 = vpop.f32.mrb[0].mxu0
    %v600 = vadd.f32 %v522, %v599
    %601 = vdwg.mxu0
    %v602 = vmax.f32 %v592, 0.0
    %v603 = vmax.f32 %v594, 0.0
    %v604 = vmax.f32 %v598, 0.0
    %v605 = vmax.f32 %v600, 0.0
    %v606 = vld [vmem:[#allocation10] sm:$0xff]
    %v607 = vld [vmem:[#allocation10 + $0x8] sm:$0xff]
    %v608 = vld [vmem:[#allocation10 + $0x10] sm:$0xff]
    %v609 = vld [vmem:[#allocation10 + $0x18] sm:$0xff]
    %v610 = vld [vmem:[#allocation10 + $0x20] sm:$0xff]
    %v611 = vld [vmem:[#allocation10 + $0x28] sm:$0xff]
    %v612 = vld [vmem:[#allocation10 + $0x30] sm:$0xff]
    %v613 = vld [vmem:[#allocation10 + $0x38] sm:$0xff]
    %v614 = vld [vmem:[#allocation10 + $0x40] sm:$0xff]
    %v615 = vld [vmem:[#allocation10 + $0x48] sm:$0xff]
    %v616 = vld [vmem:[#allocation10 + $0x50] sm:$0xff]
    %v617 = vld [vmem:[#allocation10 + $0x58] sm:$0xff]
    %v618 = vld [vmem:[#allocation10 + $0x60] sm:$0xff]
    %v619 = vld [vmem:[#allocation10 + $0x68] sm:$0xff]
    %v620 = vld [vmem:[#allocation10 + $0x70] sm:$0xff]
    %v621 = vld [vmem:[#allocation10 + $0x78] sm:$0xff]
    %v622 = vld [vmem:[#allocation10 + $0x80] sm:$0xff]
    %v623 = vld [vmem:[#allocation10 + $0x88] sm:$0xff]
    %v624 = vld [vmem:[#allocation10 + $0x90] sm:$0xff]
    %v625 = vld [vmem:[#allocation10 + $0x98] sm:$0xff]
    %v626 = vld [vmem:[#allocation10 + $0xa0] sm:$0xff]
    %v627 = vld [vmem:[#allocation10 + $0xa8] sm:$0xff]
    %v628 = vld [vmem:[#allocation10 + $0xb0] sm:$0xff]
    %v629 = vld [vmem:[#allocation10 + $0xb8] sm:$0xff]
    %v630 = vld [vmem:[#allocation10 + $0xc0] sm:$0xff]
    %v631 = vld [vmem:[#allocation10 + $0xc8] sm:$0xff]
    %v632 = vld [vmem:[#allocation10 + $0xd0] sm:$0xff]
    %v633 = vld [vmem:[#allocation10 + $0xd8] sm:$0xff]
    %v634 = vld [vmem:[#allocation10 + $0xe0] sm:$0xff]
    %v635 = vld [vmem:[#allocation10 + $0xe8] sm:$0xff]
    %v636 = vld [vmem:[#allocation10 + $0xf0] sm:$0xff]
    %v637 = vld [vmem:[#allocation10 + $0xf8] sm:$0xff]
    %v638 = vld [vmem:[%s5 + $0x1] sm:$0x1]
    %v639 = vlaneseq
    %v640 = vshrl.u32 %v639, 7
    %v641 = vsub.s32 0, %v640
    %v642 = vrot.slane %v638, %v641
    %643 = vmatprep.subr.mxu0 0.0
    %644 = vmatpush1.msra.mxu0 %v606
    %645 = vmatprep.subr.mxu0 0.0
    %646 = vmatpush1.msra.mxu0 %v607
    %647 = vmatprep.subr.mxu0 0.0
    %648 = vmatpush1.msra.mxu0 %v608
    %649 = vmatprep.subr.mxu0 0.0
    %650 = vmatpush1.msra.mxu0 %v609
    %651 = vmatprep.subr.mxu0 0.0
    %652 = vmatpush1.msra.mxu0 %v610
    %653 = vmatprep.subr.mxu0 0.0
    %654 = vmatpush1.msra.mxu0 %v611
    %655 = vmatprep.subr.mxu0 0.0
    %656 = vmatpush1.msra.mxu0 %v612
    %657 = vmatprep.subr.mxu0 0.0
    %658 = vmatpush1.msra.mxu0 %v613
    %659 = vmatprep.subr.mxu0 0.0
    %660 = vmatpush1.msra.mxu0 %v614
    %661 = vmatprep.subr.mxu0 0.0
    %662 = vmatpush1.msra.mxu0 %v615
    %663 = vmatprep.subr.mxu0 0.0
    %664 = vmatpush1.msra.mxu0 %v616
    %665 = vmatprep.subr.mxu0 0.0
    %666 = vmatpush1.msra.mxu0 %v617
    %667 = vmatprep.subr.mxu0 0.0
    %668 = vmatpush1.msra.mxu0 %v618
    %669 = vmatprep.subr.mxu0 0.0
    %670 = vmatpush1.msra.mxu0 %v619
    %671 = vmatprep.subr.mxu0 0.0
    %672 = vmatpush1.msra.mxu0 %v620
    %673 = vmatprep.subr.mxu0 0.0
    %674 = vmatpush1.msra.mxu0 %v621
    %675 = vmatprep.subr.mxu0 0.0
    %676 = vmatpush1.msra.mxu0 %v622
    %677 = vmatprep.subr.mxu0 0.0
    %678 = vmatpush1.msra.mxu0 %v623
    %679 = vmatprep.subr.mxu0 0.0
    %680 = vmatpush1.msra.mxu0 %v624
    %681 = vmatprep.subr.mxu0 0.0
    %682 = vmatpush1.msra.mxu0 %v625
    %683 = vmatprep.subr.mxu0 0.0
    %684 = vmatpush1.msra.mxu0 %v626
    %685 = vmatprep.subr.mxu0 0.0
    %686 = vmatpush1.msra.mxu0 %v627
    %687 = vmatprep.subr.mxu0 0.0
    %688 = vmatpush1.msra.mxu0 %v628
    %689 = vmatprep.subr.mxu0 0.0
    %690 = vmatpush1.msra.mxu0 %v629
    %691 = vmatprep.subr.mxu0 0.0
    %692 = vmatpush1.msra.mxu0 %v630
    %693 = vmatprep.subr.mxu0 0.0
    %694 = vmatpush1.msra.mxu0 %v631
    %695 = vmatprep.subr.mxu0 0.0
    %696 = vmatpush1.msra.mxu0 %v632
    %697 = vmatprep.subr.mxu0 0.0
    %698 = vmatpush1.msra.mxu0 %v633
    %699 = vmatprep.subr.mxu0 0.0
    %700 = vmatpush1.msra.mxu0 %v634
    %701 = vmatprep.subr.mxu0 0.0
    %702 = vmatpush1.msra.mxu0 %v635
    %703 = vmatprep.subr.mxu0 0.0
    %704 = vmatpush1.msra.mxu0 %v636
    %705 = vmatprep.subr.mxu0 0.0
    %706 = vmatpush1.msra.mxu0 %v637
    %707 = vmatprep.mubr.f32.mxu0 %v603
    %708 = vmatmul.mubr.f32.gmra.mrb[0].mxu0 %v602
    %v709 = vpop.f32.mrb[0].mxu0
    %v710 = vadd.f32 %v642, %v709
    %v711 = vpop.f32.mrb[0].mxu0
    %712 = vmatprep.mubr.f32.mxu0 %v605
    %713 = vmatmul.mubr.f32.gmra.mrb[0].mxu0 %v604
    %v714 = vpop.f32.mrb[0].mxu0
    %v715 = vadd.f32 %v642, %v714
    %v716 = vpop.f32.mrb[0].mxu0
    %717 = vdwg.mxu0
    %718 = vst [vmem:[#allocation11] sm:$0xff] %v710
    %719 = vst [vmem:[#allocation11 + $0x8] sm:$0xff] %v715
    // Predicated region
    $region46: #{tpu_custom_call.1} parent=1 // pred_check
      _
    $region47: #{tpu_custom_call.1} parent=1 // pred_check_branch
      %721 = sbr.rel (0) target = $region49
    $region48: #{tpu_custom_call.1} parent=1 // pred_region
      %s723 = ssub.s32 256, 256
      %724 = vsyncadd [#allocation4], %s723
      %s725 = sshll.u32 [#allocation11], 4
      %s726 = int_to_ptr.vmem [resolvable:$true] %s725
      %731 = dma.vmem_to_hbm [thread:$0]  %s726, 256, %s6, [#allocation4], 128, 128, 8
    $region49: #{tpu_custom_call.1} parent=1 // pred_fallthru
      _
    // Predicated region
    $region50: #{tpu_custom_call.1} parent=1 // pred_check
      _
    $region51: #{tpu_custom_call.1} parent=1 // pred_check_branch
      %733 = sbr.rel (0) target = $region53
    $region52: #{tpu_custom_call.1} parent=1 // pred_region
      %734 = dma.done [#allocation4], 256
    $region53: #{tpu_custom_call.1} parent=1 // pred_fallthru
      _
    %735 = vsyncpa [#allocation3], 1
    %736 = vsyncpa [#allocation6], 1
    %737 = vsyncpa [#allocation9], 1
    %738 = vsyncpa [#allocation4], 1

</llo_original>
